<compile_context>
chip_gen: v7x
topology: tpu7x:2x2x1
jax: 0.10.0
libtpu: 0.0.40
codegen_flags: <defaults>
</compile_context>

<pallas_src>
import jax
import jax.numpy as jnp
from jax.experimental import pallas as pl
from jax.experimental.pallas import tpu as pltpu


def _round_up(x, m):
    return (x + m - 1) // m * m


def critic_kernel(state_ref, action_ref, w1s_ref, w1a_ref, w2_ref, vecs_ref,
                  out_ref):
    """One batch tile of the 3-layer critic MLP.

    state: (TB, S)   action: (TB, A)
    w1s:   (S, H)    w1a:    (A, H)    w2: (H, H)
    vecs:  (4, H) rows = [b1, b2, w3_row, b3 broadcast across H]
    out:   (TB, 1)
    """
    s = state_ref[...]
    a = action_ref[...]

    b1 = vecs_ref[0:1, :]          # (1, H)
    b2 = vecs_ref[1:2, :]          # (1, H)
    w3 = vecs_ref[2:3, :]          # (1, H)
    b3 = vecs_ref[3:4, 0:1]        # (1, 1)

    # Layer 1: torch.cat((state, action), 1) @ W1 fused via split weights, so
    # the concatenated activation never exists in HBM.
    h1 = jnp.dot(s, w1s_ref[...], preferred_element_type=jnp.float32)
    h1 = h1 + jnp.dot(a, w1a_ref[...], preferred_element_type=jnp.float32)
    h1 = jnp.maximum(h1 + b1, 0.0)

    # Layer 2.
    h2 = jnp.dot(h1, w2_ref[...], preferred_element_type=jnp.float32) + b2
    h2 = jnp.maximum(h2, 0.0)

    # Layer 3: output width 1 -> VPU multiply + XLU lane reduction (no N=1 MXU
    # pass).  The per-row scalars are already sublane-major, so the (TB, 1)
    # store needs no sublane->lane relayout.
    out = jnp.sum(h2 * w3, axis=-1, keepdims=True)        # (TB, 1)
    out_ref[...] = (out + b3).astype(out_ref.dtype)


def _choose_batch_tile(batch):
    """Pick the batch tile TB.

    Small/medium batches run in a single grid step (extra steps only add the
    fixed per-step cost at these sizes).  Large batches use tiles of up to
    4096 rows with an EVEN number of tiles so the "parallel" grid axis can be
    sharded across v7x's two TensorCores.
    """
    tb_max = 4096
    if batch <= 1024:
        # Block equals the full batch dim -> no multiple-of-8 requirement.
        return batch
    n_tiles = 2
    while _round_up(pl.cdiv(batch, n_tiles), 8) > tb_max:
        n_tiles += 2
    return _round_up(pl.cdiv(batch, n_tiles), 8)


def critic_forward(state, action, params):
    """Pallas implementation of Critic.forward(state, action) -> (B, 1)."""
    w1s, w1a, w2, vecs = params
    B, S = state.shape
    A = action.shape[1]
    H = w2.shape[0]

    TB = _choose_batch_tile(B)
    nb = pl.cdiv(B, TB)   # no host padding: Pallas masks the partial tail block

    def weight_spec(shape):
        # Constant index_map -> DMA'd once, VMEM-resident across all steps.
        # Buffered(1): a second pipeline buffer for a constant block is waste.
        return pl.BlockSpec(shape, lambda i: (0, 0), pipeline_mode=pl.Buffered(1))

    flops = 2 * B * H * (S + A + H + 1)
    bytes_accessed = 4 * (B * (S + A + 1) + H * (S + A + H + 4))

    # Rough VMEM budget: double-buffered, lane-padded activation streams plus
    # resident weights; floor 32 MiB (v5e default scoped is only 16 MiB), cap
    # 48 MiB (headroom under v7x's 64 MiB physical VMEM).
    lane_pad = lambda n: _round_up(max(n, 1), 128)
    vmem_need = 8 * TB * (lane_pad(S) + lane_pad(A) + lane_pad(1)) + (2 << 20)
    vmem_limit = int(min(48 << 20, max(vmem_need, 32 << 20)))

    out = pl.pallas_call(
        critic_kernel,
        out_shape=jax.ShapeDtypeStruct((B, 1), jnp.float32),
        grid=(nb,),
        in_specs=[
            pl.BlockSpec((TB, S), lambda i: (i, 0)),   # state rows (streamed)
            pl.BlockSpec((TB, A), lambda i: (i, 0)),   # action rows (streamed)
            weight_spec(w1s.shape),
            weight_spec(w1a.shape),
            weight_spec(w2.shape),
            weight_spec(vecs.shape),
        ],
        out_specs=pl.BlockSpec((TB, 1), lambda i: (i, 0)),
        compiler_params=pltpu.CompilerParams(
            dimension_semantics=("parallel",),
            vmem_limit_bytes=vmem_limit),
        cost_estimate=pl.CostEstimate(
            flops=flops, transcendentals=0, bytes_accessed=bytes_accessed),
    )(state, action, w1s, w1a, w2, vecs)

    return out


def init_critic_params(key, state_dim, action_dim, hidden_size):
    """PyTorch-Linear-style init, stored in the kernel's packed layout.

    Weights are (in_features, out_features) (transpose of torch Linear.weight).
    W1 is pre-split into state/action halves; b1, b2, w3 (as a row) and b3
    (broadcast across H) are packed into a single (4, H) array.
    """
    num_inputs = state_dim + action_dim
    ks = jax.random.split(key, 6)

    def linear(kw, kb, fan_in, fan_out):
        bound = 1.0 / jnp.sqrt(fan_in)
        w = jax.random.uniform(kw, (fan_in, fan_out), jnp.float32, -bound, bound)
        b = jax.random.uniform(kb, (fan_out,), jnp.float32, -bound, bound)
        return w, b

    w1, b1 = linear(ks[0], ks[1], num_inputs, hidden_size)
    w2, b2 = linear(ks[2], ks[3], hidden_size, hidden_size)
    w3, b3 = linear(ks[4], ks[5], hidden_size, 1)

    w1s, w1a = w1[:state_dim], w1[state_dim:]
    vecs = jnp.stack(
        [b1, b2, w3[:, 0], jnp.full((hidden_size,), b3[0], jnp.float32)], axis=0)
    return (w1s, w1a, w2, vecs)


def critic_reference(state, action, params):
    """Pure-JAX reference of the PyTorch forward pass."""
    w1s, w1a, w2, vecs = params
    b1, b2, w3_row, b3_row = vecs[0], vecs[1], vecs[2], vecs[3]
    x = jnp.concatenate([state, action], axis=1)
    w1 = jnp.concatenate([w1s, w1a], axis=0)
    x = jax.nn.relu(x @ w1 + b1)
    x = jax.nn.relu(x @ w2 + b2)
    return x @ w3_row[:, None] + b3_row[0]


if __name__ == "__main__":
    # Small, forward-consistent shapes: state_dim + action_dim = num_inputs.
    state_dim = 24
    action_dim = 8
    hidden_size = 32

    key = jax.random.PRNGKey(0)
    k_params, k_data = jax.random.split(key)
    params = init_critic_params(k_params, state_dim, action_dim, hidden_size)

    # batch=8 is the canonical small case; batch=20 checks a non-multiple-of-8
    # batch (block equals the full batch dim, single grid step).
    for batch in (8, 20):
        k_s, k_a = jax.random.split(jax.random.fold_in(k_data, batch))
        state = jax.random.normal(k_s, (batch, state_dim), jnp.float32)
        action = jax.random.normal(k_a, (batch, action_dim), jnp.float32)

        out = jax.block_until_ready(critic_forward(state, action, params))
        ref = critic_reference(state, action, params)
        assert out.shape == (batch, 1), out.shape
        assert jnp.allclose(out, ref, atol=1e-5, rtol=1e-5), (out, ref)

    print("KERNEL_OK")
</pallas_src>

<mosaic_0001>
module attributes {stable_mosaic.version = 11 : i64} {
  func.func @critic_kernel(%arg0: i32, %arg1: memref<8x24xf32, #tpu.memory_space<vmem>>, %arg2: memref<8x8xf32, #tpu.memory_space<vmem>>, %arg3: memref<24x32xf32, #tpu.memory_space<vmem>>, %arg4: memref<8x32xf32, #tpu.memory_space<vmem>>, %arg5: memref<32x32xf32, #tpu.memory_space<vmem>>, %arg6: memref<4x32xf32, #tpu.memory_space<vmem>>, %arg7: memref<8x1xf32, #tpu.memory_space<vmem>>) attributes {dimension_semantics = [#tpu.dimension_semantics<parallel>], iteration_bounds = array<i64: 1>, scalar_prefetch = 0 : i64, scratch_operands = 0 : i64, tpu.core_type = #tpu.core_type<tc>, window_params = [{transform_indices = @transform_0, window_bounds = array<i64: 8, 24>}, {transform_indices = @transform_1, window_bounds = array<i64: 8, 8>}, {pipeline_mode = #tpu.pipeline_mode<synchronous>, transform_indices = @transform_2, window_bounds = array<i64: 24, 32>}, {pipeline_mode = #tpu.pipeline_mode<synchronous>, transform_indices = @transform_3, window_bounds = array<i64: 8, 32>}, {pipeline_mode = #tpu.pipeline_mode<synchronous>, transform_indices = @transform_4, window_bounds = array<i64: 32, 32>}, {pipeline_mode = #tpu.pipeline_mode<synchronous>, transform_indices = @transform_5, window_bounds = array<i64: 4, 32>}, {transform_indices = @transform_6, window_bounds = array<i64: 8, 1>}]} {
    %c0 = arith.constant 0 : index
    %c0_0 = arith.constant 0 : index
    %0 = vector.load %arg1[%c0, %c0_0] : memref<8x24xf32, #tpu.memory_space<vmem>>, vector<8x24xf32>
    %c0_1 = arith.constant 0 : index
    %c0_2 = arith.constant 0 : index
    %1 = vector.load %arg2[%c0_1, %c0_2] : memref<8x8xf32, #tpu.memory_space<vmem>>, vector<8x8xf32>
    %c0_3 = arith.constant 0 : index
    %c0_4 = arith.constant 0 : index
    %2 = vector.load %arg6[%c0_3, %c0_4] : memref<4x32xf32, #tpu.memory_space<vmem>>, vector<1x32xf32>
    %c1 = arith.constant 1 : index
    %c0_5 = arith.constant 0 : index
    %3 = vector.load %arg6[%c1, %c0_5] : memref<4x32xf32, #tpu.memory_space<vmem>>, vector<1x32xf32>
    %c2 = arith.constant 2 : index
    %c0_6 = arith.constant 0 : index
    %4 = vector.load %arg6[%c2, %c0_6] : memref<4x32xf32, #tpu.memory_space<vmem>>, vector<1x32xf32>
    %c3 = arith.constant 3 : index
    %c0_7 = arith.constant 0 : index
    %5 = vector.load %arg6[%c3, %c0_7] : memref<4x32xf32, #tpu.memory_space<vmem>>, vector<1x1xf32>
    %c0_8 = arith.constant 0 : index
    %c0_9 = arith.constant 0 : index
    %6 = vector.load %arg3[%c0_8, %c0_9] : memref<24x32xf32, #tpu.memory_space<vmem>>, vector<24x32xf32>
    %cst = arith.constant dense<0.000000e+00> : vector<8x32xf32>
    %7 = tpu.matmul %0, %6, %cst {dimension_numbers = #tpu.dot_dimension_numbers<[1], [0], [0], [1], [0, 0, 1, 1], [], []>} : vector<8x24xf32>, vector<24x32xf32>, vector<8x32xf32> -> vector<8x32xf32>
    %c0_10 = arith.constant 0 : index
    %c0_11 = arith.constant 0 : index
    %8 = vector.load %arg4[%c0_10, %c0_11] : memref<8x32xf32, #tpu.memory_space<vmem>>, vector<8x32xf32>
    %cst_12 = arith.constant dense<0.000000e+00> : vector<8x32xf32>
    %9 = tpu.matmul %1, %8, %cst_12 {dimension_numbers = #tpu.dot_dimension_numbers<[1], [0], [0], [1], [0, 0, 1, 1], [], []>} : vector<8x8xf32>, vector<8x32xf32>, vector<8x32xf32> -> vector<8x32xf32>
    %10 = arith.addf %7, %9 : vector<8x32xf32>
    %11 = vector.broadcast %2 : vector<1x32xf32> to vector<8x32xf32>
    %12 = arith.addf %10, %11 : vector<8x32xf32>
    %cst_13 = arith.constant 0.000000e+00 : f32
    %13 = vector.broadcast %cst_13 : f32 to vector<8x32xf32>
    %14 = arith.maximumf %12, %13 : vector<8x32xf32>
    %c0_14 = arith.constant 0 : index
    %c0_15 = arith.constant 0 : index
    %15 = vector.load %arg5[%c0_14, %c0_15] : memref<32x32xf32, #tpu.memory_space<vmem>>, vector<32x32xf32>
    %cst_16 = arith.constant dense<0.000000e+00> : vector<8x32xf32>
    %16 = tpu.matmul %14, %15, %cst_16 {dimension_numbers = #tpu.dot_dimension_numbers<[1], [0], [0], [1], [0, 0, 1, 1], [], []>} : vector<8x32xf32>, vector<32x32xf32>, vector<8x32xf32> -> vector<8x32xf32>
    %17 = vector.broadcast %3 : vector<1x32xf32> to vector<8x32xf32>
    %18 = arith.addf %16, %17 : vector<8x32xf32>
    %cst_17 = arith.constant 0.000000e+00 : f32
    %19 = vector.broadcast %cst_17 : f32 to vector<8x32xf32>
    %20 = arith.maximumf %18, %19 : vector<8x32xf32>
    %21 = vector.broadcast %4 : vector<1x32xf32> to vector<8x32xf32>
    %22 = arith.mulf %20, %21 : vector<8x32xf32>
    %cst_18 = arith.constant dense<0.000000e+00> : vector<8xf32>
    %23 = vector.multi_reduction <add>, %22, %cst_18 [1] : vector<8x32xf32> to vector<8xf32>
    %24 = vector.shape_cast %23 : vector<8xf32> to vector<8x1xf32>
    %25 = vector.broadcast %5 : vector<1x1xf32> to vector<8x1xf32>
    %26 = arith.addf %24, %25 : vector<8x1xf32>
    %c0_19 = arith.constant 0 : index
    %c0_20 = arith.constant 0 : index
    %27 = vector.load %arg7[%c0_19, %c0_20] : memref<8x1xf32, #tpu.memory_space<vmem>>, vector<8x1xf32>
    tpu.vector_store %arg7[%c0_19, %c0_20], %26 {strides = array<i32>} : memref<8x1xf32, #tpu.memory_space<vmem>>, vector<8x1xf32>,
    return
  }
  func.func @transform_0(%arg0: i32) -> (i32, i32) {
    %c0_i32 = arith.constant 0 : i32
    %c0_i32_0 = arith.constant 0 : i32
    return %arg0, %c0_i32 : i32, i32
  }
  func.func @transform_1(%arg0: i32) -> (i32, i32) {
    %c0_i32 = arith.constant 0 : i32
    %c0_i32_0 = arith.constant 0 : i32
    return %arg0, %c0_i32 : i32, i32
  }
  func.func @transform_2(%arg0: i32) -> (i32, i32) {
    %c0_i32 = arith.constant 0 : i32
    %c0_i32_0 = arith.constant 0 : i32
    %c0_i32_1 = arith.constant 0 : i32
    return %c0_i32, %c0_i32_0 : i32, i32
  }
  func.func @transform_3(%arg0: i32) -> (i32, i32) {
    %c0_i32 = arith.constant 0 : i32
    %c0_i32_0 = arith.constant 0 : i32
    %c0_i32_1 = arith.constant 0 : i32
    return %c0_i32, %c0_i32_0 : i32, i32
  }
  func.func @transform_4(%arg0: i32) -> (i32, i32) {
    %c0_i32 = arith.constant 0 : i32
    %c0_i32_0 = arith.constant 0 : i32
    %c0_i32_1 = arith.constant 0 : i32
    return %c0_i32, %c0_i32_0 : i32, i32
  }
  func.func @transform_5(%arg0: i32) -> (i32, i32) {
    %c0_i32 = arith.constant 0 : i32
    %c0_i32_0 = arith.constant 0 : i32
    %c0_i32_1 = arith.constant 0 : i32
    return %c0_i32, %c0_i32_0 : i32, i32
  }
  func.func @transform_6(%arg0: i32) -> (i32, i32) {
    %c0_i32 = arith.constant 0 : i32
    %c0_i32_0 = arith.constant 0 : i32
    return %arg0, %c0_i32 : i32, i32
  }
}

</mosaic_0001>

<llo_original>
// kernel: tpu_custom_call.1
$region0: #{tpu_custom_call.1}
  #allocation0 [shape = 'u32[]', space=smem, size = 0x4, offset = 0x4, fixed_abs, tag = 'smem constant byte address 0x4 - core index']
  #allocation1 [shape = 'u32[144,128]{1,0:T(1,128)}', space=vmem, size = 0x12000, scoped, tag = 'internal scratch']
  %s0 = inlined_call_operand.hbm [shape: f32[8,24], index: 0, kind: input, shape index: {}]
  %s1 = inlined_call_operand.hbm [shape: f32[8,8], index: 1, kind: input, shape index: {}]
  %s2 = inlined_call_operand.hbm [shape: f32[24,32], index: 2, kind: input, shape index: {}]
  %s3 = inlined_call_operand.vmem [shape: f32[8,32], index: 3, kind: input, shape index: {}]
  %s4 = inlined_call_operand.hbm [shape: f32[32,32], index: 4, kind: input, shape index: {}]
  %s5 = inlined_call_operand.vmem [shape: f32[4,32], index: 5, kind: input, shape index: {}]
  %s6 = inlined_call_operand.vmem [shape: f32[8,1], index: 6, kind: output, shape index: {}]
  %s7 = sld [smem:[#allocation0]]
  $region50: #{tpu_custom_call.1} parent=0
    _
  %s9 = ssub.s32 1, %s7
  %s10 = scalar_select 0, %s9, %s7
  $region1: #{tpu_custom_call.1} parent=0
    #allocation2 [shape = 'u8[4096]{0}', space=vmem, size = 0x1000, scoped, tag = 'input window, operand 0, single buffered']
    #allocation3 [shape = 's32[1]{0}', space=sflag, size = 0x4, scoped, tag = 'scoped memory for tpu_custom_call.1']
    #allocation4 [shape = 'u8[4096]{0}', space=vmem, size = 0x1000, scoped, tag = 'input window, operand 1, single buffered']
    #allocation5 [shape = 's32[1]{0}', space=sflag, size = 0x4, scoped, tag = 'scoped memory for tpu_custom_call.1']
    #allocation6 [shape = 'u8[12288]{0}', space=vmem, size = 0x3000, scoped, tag = 'input window, operand 2, single buffered']
    #allocation7 [shape = 'u8[16384]{0}', space=vmem, size = 0x4000, scoped, tag = 'input window, operand 4, single buffered']
    #allocation8 [shape = 's32[1]{0}', space=sflag, size = 0x4, scoped, tag = 'scoped memory for tpu_custom_call.1']
    %11 = vsyncpa [#allocation3], 0
    %12 = vsyncpa [#allocation5], 0
    %13 = vsyncpa [#allocation8], 0
    // Predicated region
    $region2: #{tpu_custom_call.1} parent=1 // pred_check
      _
    $region3: #{tpu_custom_call.1} parent=1 // pred_check_branch
      %15 = sbr.rel (0) target = $region5
    $region4: #{tpu_custom_call.1} parent=1 // pred_region
      %s17 = ssub.s32 128, 128
      %18 = vsyncadd [#allocation3], %s17
      %s20 = sshll.u32 [#allocation2], 4
      %s21 = int_to_ptr.vmem [resolvable:$true] %s20
      %23 = dma.hbm_to_vmem [thread:$0]  %s0, 128, %s21, [#allocation3]
    $region5: #{tpu_custom_call.1} parent=1 // pred_fallthru
      _
    // Predicated region
    $region6: #{tpu_custom_call.1} parent=1 // pred_check
      _
    $region7: #{tpu_custom_call.1} parent=1 // pred_check_branch
      %25 = sbr.rel (0) target = $region9
    $region8: #{tpu_custom_call.1} parent=1 // pred_region
      %s27 = ssub.s32 128, 128
      %28 = vsyncadd [#allocation5], %s27
      %s30 = sshll.u32 [#allocation4], 4
      %s31 = int_to_ptr.vmem [resolvable:$true] %s30
      %33 = dma.hbm_to_vmem [thread:$0]  %s1, 128, %s31, [#allocation5]
    $region9: #{tpu_custom_call.1} parent=1 // pred_fallthru
      _
    // Predicated region
    $region10: #{tpu_custom_call.1} parent=1 // pred_check
      _
    $region11: #{tpu_custom_call.1} parent=1 // pred_check_branch
      %35 = sbr.rel (0) target = $region13
    $region12: #{tpu_custom_call.1} parent=1 // pred_region
      %s37 = ssub.s32 384, 384
      %38 = vsyncadd [#allocation5], %s37
      %s39 = sshll.u32 [#allocation6], 4
      %s40 = int_to_ptr.vmem [resolvable:$true] %s39
      %45 = dma.hbm_to_vmem [thread:$0]  %s2, 384, %s40, [#allocation5], 128, 128, 8
    $region13: #{tpu_custom_call.1} parent=1 // pred_fallthru
      _
    // Predicated region
    $region14: #{tpu_custom_call.1} parent=1 // pred_check
      _
    $region15: #{tpu_custom_call.1} parent=1 // pred_check_branch
      %47 = sbr.rel (0) target = $region17
    $region16: #{tpu_custom_call.1} parent=1 // pred_region
      _
    $region17: #{tpu_custom_call.1} parent=1 // pred_fallthru
      _
    // Predicated region
    $region18: #{tpu_custom_call.1} parent=1 // pred_check
      _
    $region19: #{tpu_custom_call.1} parent=1 // pred_check_branch
      %49 = sbr.rel (0) target = $region21
    $region20: #{tpu_custom_call.1} parent=1 // pred_region
      %s51 = ssub.s32 512, 512
      %52 = vsyncadd [#allocation8], %s51
      %s53 = sshll.u32 [#allocation7], 4
      %s54 = int_to_ptr.vmem [resolvable:$true] %s53
      %59 = dma.hbm_to_vmem [thread:$0]  %s4, 512, %s54, [#allocation8], 128, 128, 8
    $region21: #{tpu_custom_call.1} parent=1 // pred_fallthru
      _
    // Predicated region
    $region22: #{tpu_custom_call.1} parent=1 // pred_check
      _
    $region23: #{tpu_custom_call.1} parent=1 // pred_check_branch
      %61 = sbr.rel (0) target = $region25
    $region24: #{tpu_custom_call.1} parent=1 // pred_region
      _
    $region25: #{tpu_custom_call.1} parent=1 // pred_fallthru
      _
    // Predicated region
    $region26: #{tpu_custom_call.1} parent=1 // pred_check
      _
    $region27: #{tpu_custom_call.1} parent=1 // pred_check_branch
      %63 = sbr.rel (0) target = $region29
    $region28: #{tpu_custom_call.1} parent=1 // pred_region
      %64 = dma.done [#allocation3], 128
    $region29: #{tpu_custom_call.1} parent=1 // pred_fallthru
      _
    // Predicated region
    $region30: #{tpu_custom_call.1} parent=1 // pred_check
      _
    $region31: #{tpu_custom_call.1} parent=1 // pred_check_branch
      %66 = sbr.rel (0) target = $region33
    $region32: #{tpu_custom_call.1} parent=1 // pred_region
      %67 = dma.done [#allocation5], 128
    $region33: #{tpu_custom_call.1} parent=1 // pred_fallthru
      _
    // Predicated region
    $region34: #{tpu_custom_call.1} parent=1 // pred_check
      _
    $region35: #{tpu_custom_call.1} parent=1 // pred_check_branch
      %69 = sbr.rel (0) target = $region37
    $region36: #{tpu_custom_call.1} parent=1 // pred_region
      %70 = dma.done [#allocation5], 384
    $region37: #{tpu_custom_call.1} parent=1 // pred_fallthru
      _
    // Predicated region
    $region38: #{tpu_custom_call.1} parent=1 // pred_check
      _
    $region39: #{tpu_custom_call.1} parent=1 // pred_check_branch
      %72 = sbr.rel (0) target = $region41
    $region40: #{tpu_custom_call.1} parent=1 // pred_region
      %73 = dma.done [#allocation8], 512
    $region41: #{tpu_custom_call.1} parent=1 // pred_fallthru
      _
    %v74 = vld [vmem:[#allocation2] sm:$0xff]
    %v75 = vld [vmem:[#allocation4] sm:$0xff]
    %v76 = vld [vmem:[%s5] sm:$0x1]
    %v77 = vld [vmem:[%s5 + $0x1] sm:$0x1]
    %v78 = vld [vmem:[%s5 + $0x2] sm:$0x1]
    %v79 = vld [vmem:[%s5 + $0x3] sm:$0x1]
    %v80 = vld [vmem:[#allocation6] sm:$0xff]
    %v81 = vld [vmem:[#allocation6 + $0x8] sm:$0xff]
    %v82 = vld [vmem:[#allocation6 + $0x10] sm:$0xff]
    %v83 = vld [vmem:[%s3] sm:$0xff]
    %vm84 = vcmask 64512
    %v86 = vsel %vm84, %v75, 0
    %88 = vmatprep.subr.mxu0 0.0
    %89 = vmatpush1.msra.mxu0 %v83
    %90 = vmatprep.subr.mxu0 0.0
    %91 = vmatpush1.msra.mxu0 0.0
    %92 = vmatprep.subr.mxu0 0.0
    %93 = vmatpush1.msra.mxu0 0.0
    %94 = vmatprep.subr.mxu0 0.0
    %95 = vmatpush1.msra.mxu0 0.0
    %96 = vmatprep.subr.mxu0 0.0
    %97 = vmatpush1.msra.mxu0 0.0
    %98 = vmatprep.subr.mxu0 0.0
    %99 = vmatpush1.msra.mxu0 0.0
    %100 = vmatprep.subr.mxu0 0.0
    %101 = vmatpush1.msra.mxu0 0.0
    %102 = vmatprep.subr.mxu0 0.0
    %103 = vmatpush1.msra.mxu0 0.0
    %104 = vmatprep.subr.mxu0 0.0
    %105 = vmatpush1.msra.mxu0 0.0
    %106 = vmatprep.subr.mxu0 0.0
    %107 = vmatpush1.msra.mxu0 0.0
    %108 = vmatprep.subr.mxu0 0.0
    %109 = vmatpush1.msra.mxu0 0.0
    %110 = vmatprep.subr.mxu0 0.0
    %111 = vmatpush1.msra.mxu0 0.0
    %112 = vmatprep.subr.mxu0 0.0
    %113 = vmatpush1.msra.mxu0 0.0
    %114 = vmatprep.subr.mxu0 0.0
    %115 = vmatpush1.msra.mxu0 0.0
    %116 = vmatprep.subr.mxu0 0.0
    %117 = vmatpush1.msra.mxu0 0.0
    %118 = vmatprep.subr.mxu0 0.0
    %119 = vmatpush1.msra.mxu0 0.0
    %120 = vmatprep.subr.mxu0 0.0
    %121 = vmatpush1.msra.mxu0 0.0
    %122 = vmatprep.subr.mxu0 0.0
    %123 = vmatpush1.msra.mxu0 0.0
    %124 = vmatprep.subr.mxu0 0.0
    %125 = vmatpush1.msra.mxu0 0.0
    %126 = vmatprep.subr.mxu0 0.0
    %127 = vmatpush1.msra.mxu0 0.0
    %128 = vmatprep.subr.mxu0 0.0
    %129 = vmatpush1.msra.mxu0 0.0
    %130 = vmatprep.subr.mxu0 0.0
    %131 = vmatpush1.msra.mxu0 0.0
    %132 = vmatprep.subr.mxu0 0.0
    %133 = vmatpush1.msra.mxu0 0.0
    %134 = vmatprep.subr.mxu0 0.0
    %135 = vmatpush1.msra.mxu0 0.0
    %136 = vmatprep.subr.mxu0 0.0
    %137 = vmatpush1.msra.mxu0 0.0
    %138 = vmatprep.subr.mxu0 0.0
    %139 = vmatpush1.msra.mxu0 0.0
    %140 = vmatprep.subr.mxu0 0.0
    %141 = vmatpush1.msra.mxu0 0.0
    %142 = vmatprep.subr.mxu0 0.0
    %143 = vmatpush1.msra.mxu0 0.0
    %144 = vmatprep.subr.mxu0 0.0
    %145 = vmatpush1.msra.mxu0 0.0
    %146 = vmatprep.subr.mxu0 0.0
    %147 = vmatpush1.msra.mxu0 0.0
    %148 = vmatprep.subr.mxu0 0.0
    %149 = vmatpush1.msra.mxu0 0.0
    %150 = vmatprep.subr.mxu0 0.0
    %151 = vmatpush1.msra.mxu0 0.0
    %152 = vmatprep.mubr.f32.mxu0 0.0
    %153 = vmatmul.mubr.f32.gmra.mrb[0].mxu0 %v86
    %v154 = vpop.f32.mrb[0].mxu0
    %v155 = vadd.f32 0.0, %v154
    %v156 = vpop.f32.mrb[0].mxu0
    %157 = vdwg.mxu0
    %vm158 = vcmask 195584
    %v160 = vsel %vm158, %v74, 0
    %162 = vmatprep.subr.mxu0 0.0
    %163 = vmatpush1.msra.mxu0 %v80
    %164 = vmatprep.subr.mxu0 0.0
    %165 = vmatpush1.msra.mxu0 %v81
    %166 = vmatprep.subr.mxu0 0.0
    %167 = vmatpush1.msra.mxu0 %v82
    %168 = vmatprep.subr.mxu0 0.0
    %169 = vmatpush1.msra.mxu0 0.0
    %170 = vmatprep.subr.mxu0 0.0
    %171 = vmatpush1.msra.mxu0 0.0
    %172 = vmatprep.subr.mxu0 0.0
    %173 = vmatpush1.msra.mxu0 0.0
    %174 = vmatprep.subr.mxu0 0.0
    %175 = vmatpush1.msra.mxu0 0.0
    %176 = vmatprep.subr.mxu0 0.0
    %177 = vmatpush1.msra.mxu0 0.0
    %178 = vmatprep.subr.mxu0 0.0
    %179 = vmatpush1.msra.mxu0 0.0
    %180 = vmatprep.subr.mxu0 0.0
    %181 = vmatpush1.msra.mxu0 0.0
    %182 = vmatprep.subr.mxu0 0.0
    %183 = vmatpush1.msra.mxu0 0.0
    %184 = vmatprep.subr.mxu0 0.0
    %185 = vmatpush1.msra.mxu0 0.0
    %186 = vmatprep.subr.mxu0 0.0
    %187 = vmatpush1.msra.mxu0 0.0
    %188 = vmatprep.subr.mxu0 0.0
    %189 = vmatpush1.msra.mxu0 0.0
    %190 = vmatprep.subr.mxu0 0.0
    %191 = vmatpush1.msra.mxu0 0.0
    %192 = vmatprep.subr.mxu0 0.0
    %193 = vmatpush1.msra.mxu0 0.0
    %194 = vmatprep.subr.mxu0 0.0
    %195 = vmatpush1.msra.mxu0 0.0
    %196 = vmatprep.subr.mxu0 0.0
    %197 = vmatpush1.msra.mxu0 0.0
    %198 = vmatprep.subr.mxu0 0.0
    %199 = vmatpush1.msra.mxu0 0.0
    %200 = vmatprep.subr.mxu0 0.0
    %201 = vmatpush1.msra.mxu0 0.0
    %202 = vmatprep.subr.mxu0 0.0
    %203 = vmatpush1.msra.mxu0 0.0
    %204 = vmatprep.subr.mxu0 0.0
    %205 = vmatpush1.msra.mxu0 0.0
    %206 = vmatprep.subr.mxu0 0.0
    %207 = vmatpush1.msra.mxu0 0.0
    %208 = vmatprep.subr.mxu0 0.0
    %209 = vmatpush1.msra.mxu0 0.0
    %210 = vmatprep.subr.mxu0 0.0
    %211 = vmatpush1.msra.mxu0 0.0
    %212 = vmatprep.subr.mxu0 0.0
    %213 = vmatpush1.msra.mxu0 0.0
    %214 = vmatprep.subr.mxu0 0.0
    %215 = vmatpush1.msra.mxu0 0.0
    %216 = vmatprep.subr.mxu0 0.0
    %217 = vmatpush1.msra.mxu0 0.0
    %218 = vmatprep.subr.mxu0 0.0
    %219 = vmatpush1.msra.mxu0 0.0
    %220 = vmatprep.subr.mxu0 0.0
    %221 = vmatpush1.msra.mxu0 0.0
    %222 = vmatprep.subr.mxu0 0.0
    %223 = vmatpush1.msra.mxu0 0.0
    %224 = vmatprep.subr.mxu0 0.0
    %225 = vmatpush1.msra.mxu0 0.0
    %226 = vmatprep.mubr.f32.mxu0 0.0
    %227 = vmatmul.mubr.f32.gmra.mrb[0].mxu0 %v160
    %v228 = vpop.f32.mrb[0].mxu0
    %v229 = vadd.f32 %v155, %v228
    %v230 = vpop.f32.mrb[0].mxu0
    %231 = vdwg.mxu0
    %v232 = vlaneseq
    %v233 = vshrl.u32 %v232, 7
    %v234 = vsub.s32 0, %v233
    %v235 = vrot.slane %v76, %v234
    %v236 = vadd.f32 %v229, %v235
    %v237 = vmax.f32 %v236, 0.0
    %v238 = vld [vmem:[#allocation7] sm:$0xff]
    %v239 = vld [vmem:[#allocation7 + $0x8] sm:$0xff]
    %v240 = vld [vmem:[#allocation7 + $0x10] sm:$0xff]
    %v241 = vld [vmem:[#allocation7 + $0x18] sm:$0xff]
    %v242 = vlaneseq
    %v243 = vshrl.u32 %v242, 7
    %v244 = vsub.s32 0, %v243
    %v245 = vrot.slane %v77, %v244
    %vm246 = vcmask 261120
    %v248 = vsel %vm246, %v237, 0
    %250 = vmatprep.subr.mxu0 0.0
    %251 = vmatpush1.msra.mxu0 %v238
    %252 = vmatprep.subr.mxu0 0.0
    %253 = vmatpush1.msra.mxu0 %v239
    %254 = vmatprep.subr.mxu0 0.0
    %255 = vmatpush1.msra.mxu0 %v240
    %256 = vmatprep.subr.mxu0 0.0
    %257 = vmatpush1.msra.mxu0 %v241
    %258 = vmatprep.subr.mxu0 0.0
    %259 = vmatpush1.msra.mxu0 0.0
    %260 = vmatprep.subr.mxu0 0.0
    %261 = vmatpush1.msra.mxu0 0.0
    %262 = vmatprep.subr.mxu0 0.0
    %263 = vmatpush1.msra.mxu0 0.0
    %264 = vmatprep.subr.mxu0 0.0
    %265 = vmatpush1.msra.mxu0 0.0
    %266 = vmatprep.subr.mxu0 0.0
    %267 = vmatpush1.msra.mxu0 0.0
    %268 = vmatprep.subr.mxu0 0.0
    %269 = vmatpush1.msra.mxu0 0.0
    %270 = vmatprep.subr.mxu0 0.0
    %271 = vmatpush1.msra.mxu0 0.0
    %272 = vmatprep.subr.mxu0 0.0
    %273 = vmatpush1.msra.mxu0 0.0
    %274 = vmatprep.subr.mxu0 0.0
    %275 = vmatpush1.msra.mxu0 0.0
    %276 = vmatprep.subr.mxu0 0.0
    %277 = vmatpush1.msra.mxu0 0.0
    %278 = vmatprep.subr.mxu0 0.0
    %279 = vmatpush1.msra.mxu0 0.0
    %280 = vmatprep.subr.mxu0 0.0
    %281 = vmatpush1.msra.mxu0 0.0
    %282 = vmatprep.subr.mxu0 0.0
    %283 = vmatpush1.msra.mxu0 0.0
    %284 = vmatprep.subr.mxu0 0.0
    %285 = vmatpush1.msra.mxu0 0.0
    %286 = vmatprep.subr.mxu0 0.0
    %287 = vmatpush1.msra.mxu0 0.0
    %288 = vmatprep.subr.mxu0 0.0
    %289 = vmatpush1.msra.mxu0 0.0
    %290 = vmatprep.subr.mxu0 0.0
    %291 = vmatpush1.msra.mxu0 0.0
    %292 = vmatprep.subr.mxu0 0.0
    %293 = vmatpush1.msra.mxu0 0.0
    %294 = vmatprep.subr.mxu0 0.0
    %295 = vmatpush1.msra.mxu0 0.0
    %296 = vmatprep.subr.mxu0 0.0
    %297 = vmatpush1.msra.mxu0 0.0
    %298 = vmatprep.subr.mxu0 0.0
    %299 = vmatpush1.msra.mxu0 0.0
    %300 = vmatprep.subr.mxu0 0.0
    %301 = vmatpush1.msra.mxu0 0.0
    %302 = vmatprep.subr.mxu0 0.0
    %303 = vmatpush1.msra.mxu0 0.0
    %304 = vmatprep.subr.mxu0 0.0
    %305 = vmatpush1.msra.mxu0 0.0
    %306 = vmatprep.subr.mxu0 0.0
    %307 = vmatpush1.msra.mxu0 0.0
    %308 = vmatprep.subr.mxu0 0.0
    %309 = vmatpush1.msra.mxu0 0.0
    %310 = vmatprep.subr.mxu0 0.0
    %311 = vmatpush1.msra.mxu0 0.0
    %312 = vmatprep.subr.mxu0 0.0
    %313 = vmatpush1.msra.mxu0 0.0
    %314 = vmatprep.mubr.f32.mxu0 0.0
    %315 = vmatmul.mubr.f32.gmra.mrb[0].mxu0 %v248
    %v316 = vpop.f32.mrb[0].mxu0
    %v317 = vadd.f32 %v245, %v316
    %v318 = vpop.f32.mrb[0].mxu0
    %319 = vdwg.mxu0
    %v320 = vmax.f32 %v317, 0.0
    %v321 = vlaneseq
    %v322 = vshrl.u32 %v321, 7
    %v323 = vsub.s32 0, %v322
    %v324 = vrot.slane %v78, %v323
    %v325 = vmul.f32 %v320, %v324
    %v326 = vsel %vm246, %v325, 0.0
    %327 = vadd.xlane.f32.xlu0 %v326
    %v328 = vpop.xlane.xlu0 %327
    %v329 = vlaneseq
    %v330 = vshrl.u32 %v329, 7
    %v331 = vsub.s32 0, %v330
    %v332 = vrot.slane %v79, %v331
    %v333 = vadd.f32 %v328, %v332
    %vm334 = vcmask 7168
    %335 = vst.msk [vmem:[%s6] sm:$0xff] %vm334, %v333
    // Predicated region
    $region42: #{tpu_custom_call.1} parent=1 // pred_check
      _
    $region43: #{tpu_custom_call.1} parent=1 // pred_check_branch
      %337 = sbr.rel (0) target = $region45
    $region44: #{tpu_custom_call.1} parent=1 // pred_region
      _
    $region45: #{tpu_custom_call.1} parent=1 // pred_fallthru
      _
    // Predicated region
    $region46: #{tpu_custom_call.1} parent=1 // pred_check
      _
    $region47: #{tpu_custom_call.1} parent=1 // pred_check_branch
      %339 = sbr.rel (0) target = $region49
    $region48: #{tpu_custom_call.1} parent=1 // pred_region
      _
    $region49: #{tpu_custom_call.1} parent=1 // pred_fallthru
      _
    %340 = vsyncpa [#allocation3], 1
    %341 = vsyncpa [#allocation5], 1
    %342 = vsyncpa [#allocation8], 1

</llo_original>
